<compile_context>
chip_gen: v5e
topology: v5e:2x2
jax: 0.10.0
libtpu: 0.0.40
codegen_flags: <defaults>
</compile_context>

<pallas_src>
import functools
import math

import jax
import jax.numpy as jnp
from jax.experimental import pallas as pl
from jax.experimental.pallas import tpu as pltpu


def _round_up(x, n):
    return (x + n - 1) // n * n


def _l2_normalize(v):
    # Matches F.normalize(eps=1e-12): v / max(||v||, 1e-12).
    v = v.astype(jnp.float32)
    ss = jnp.sum(v * v, axis=-1, keepdims=True)
    return v * jax.lax.rsqrt(jnp.maximum(ss, 1e-24))


def arcface_kernel(flag_ref, x_ref, wt_ref, labels_ref, out_ref, *cos_refs,
                   s, cosm, sinm, m, tc):
    c = pl.program_id(0)          # class tile (outer -> weight tile resident)
    b = pl.program_id(1)          # batch tile (inner -> x/labels stream)
    n_ct = pl.num_programs(0)

    # bf16 operands, f32 accumulation on the MXU.  Weight arrives pre-
    # normalized and pre-transposed, x arrives pre-normalized: no VPU/XLU
    # work before the matmul.
    cosine = jnp.dot(x_ref[...], wt_ref[...],
                     preferred_element_type=jnp.float32)

    for cos_ref in cos_refs:          # optional raw-cosine output
        cos_ref[...] = cosine.astype(cos_ref.dtype)

    # Scalar-prefetched flag: does any label of this batch tile land in this
    # class tile?  If not, skip the whole margin epilogue.
    has_label = flag_ref[b * n_ct + c] != 0

    @pl.when(has_label)
    def _():
        # Clamp at 0 so bf16 round-off (|cosine| slightly > 1) can't NaN.
        sine = jnp.sqrt(jnp.maximum(1.0 - cosine * cosine, 0.0))
        phi = cosine * cosm - sine * sinm
        phi = jnp.where(cosine + cosm > 0, phi, cosine - sinm * m)
        # Tile-local label compare: (TB,1) subtract instead of (TB,TC) add.
        labels_local = labels_ref[...] - c * tc               # (TB, 1) int32
        col = jax.lax.broadcasted_iota(jnp.int32, cosine.shape, 1)
        out_ref[...] = jnp.where(col == labels_local, phi, cosine) * s

    @pl.when(jnp.logical_not(has_label))
    def _():
        out_ref[...] = cosine * s


def _vmem_budget():
    """(tile budget, scoped vmem limit) chosen per TPU generation."""
    try:
        cap = pltpu.get_tpu_info().vmem_capacity_bytes
    except Exception:
        cap = 64 << 20                    # assume smallest (v7x per-TC) VMEM
    if cap >= (128 << 20):                # v5e / v6e: 128 MiB
        return 80 << 20, 100 << 20
    return 32 << 20, 52 << 20             # v7x: 64 MiB physical per TC


def _choose_tiles(B, C, F, budget_bytes):
    """Pick (TB, TC) so the double-buffered working set fits the budget."""
    # Multiple of 16 (bf16 sublane packing); cap 256 fills the v6e/v7x MXU.
    TB = min(_round_up(B, 16), 256)

    def vmem_cost(tc):
        return (2 * TB * F * 2            # bf16 x blocks (double buffered)
                + 2 * F * tc * 2          # bf16 weight blocks (resident + next)
                + 2 * TB * 128 * 4        # labels block (lane padded)
                + 2 * 2 * TB * tc * 4     # two f32 (TB,TC) output blocks, x2 buf
                + 4 * TB * tc * 4)        # f32 epilogue temporaries (cos/sine/phi/iota)

    tc = 128
    while tc * 2 <= 4096 and vmem_cost(tc * 2) <= budget_bytes:
        tc *= 2
    tc = min(tc, _round_up(C, 128))       # don't exceed (padded) class count
    Bp = _round_up(B, TB)
    Cp = _round_up(C, tc)
    return TB, tc, Bp, Cp


def arcface_forward(inputs, weight, labels, *, s=64.0, m=0.5,
                    return_cosine=True):
    """inputs: (B, F) float, weight: (C, F) float, labels: (B,) int."""
    B, F = inputs.shape
    C, F2 = weight.shape
    assert F == F2, "feature dims of inputs and weight must match"

    budget_bytes, vmem_limit = _vmem_budget()
    TB, TC, Bp, Cp = _choose_tiles(B, C, F, budget_bytes)
    n_bt, n_ct = Bp // TB, Cp // TC

    # Pre-normalize both operands in the wrapper, cast to bf16, and present
    # the weight already transposed to (F, C) so the kernel matmul needs no
    # in-kernel transpose or normalization.
    x_n = _l2_normalize(inputs).astype(jnp.bfloat16)
    w_t = _l2_normalize(weight).astype(jnp.bfloat16).T      # (F, C)

    x_p = x_n if Bp == B else jnp.pad(x_n, ((0, Bp - B), (0, 0)))
    wt_p = w_t if Cp == C else jnp.pad(w_t, ((0, 0), (0, Cp - C)))
    lab = labels.astype(jnp.int32).reshape(B, 1)
    lab_p = lab if Bp == B else jnp.pad(lab, ((0, Bp - B), (0, 0)))

    # Per-(batch-tile, class-tile) flag: 1 iff some label of that batch tile
    # falls inside that class tile.  Flattened 1-D for compact SMEM layout.
    b_tile = jnp.arange(B, dtype=jnp.int32) // TB
    c_tile = labels.astype(jnp.int32) // TC
    flags = jnp.zeros((n_bt, n_ct), jnp.int32).at[b_tile, c_tile].set(1)
    flags_flat = flags.reshape(-1)

    kernel = functools.partial(
        arcface_kernel, s=float(s), cosm=math.cos(m), sinm=math.sin(m),
        m=float(m), tc=TC)

    out_shape = [jax.ShapeDtypeStruct((Bp, Cp), jnp.float32)]
    out_specs = [pl.BlockSpec((TB, TC), lambda c, b, flg: (b, c))]
    if return_cosine:
        out_shape.append(jax.ShapeDtypeStruct((Bp, Cp), jnp.float32))
        out_specs.append(pl.BlockSpec((TB, TC), lambda c, b, flg: (b, c)))

    grid_spec = pltpu.PrefetchScalarGridSpec(
        num_scalar_prefetch=1,
        # Class axis OUTER: the weight block index depends only on it, so the
        # dominant weight stream is DMA'd exactly once per class tile.
        grid=(n_ct, n_bt),
        in_specs=[
            pl.BlockSpec((TB, F), lambda c, b, flg: (b, 0)),   # x_norm (bf16)
            pl.BlockSpec((F, TC), lambda c, b, flg: (0, c)),   # weight.T (bf16, resident)
            pl.BlockSpec((TB, 1), lambda c, b, flg: (b, 0)),   # labels
        ],
        out_specs=out_specs,
    )

    results = pl.pallas_call(
        kernel,
        grid_spec=grid_spec,
        out_shape=tuple(out_shape),
        compiler_params=pltpu.CompilerParams(
            # No cross-step accumulation and no scratch carried across grid
            # steps -> both axes are truly parallel (megacore can shard the
            # class axis on v7x even when there is a single batch tile).
            dimension_semantics=("parallel", "parallel"),
            vmem_limit_bytes=vmem_limit),
    )(flags_flat, x_p, wt_p, lab_p)

    out = results[0][:B, :C]
    if return_cosine:
        return out, results[1][:B, :C]
    return out


def _reference(inputs, weight, labels, *, s=64.0, m=0.5):
    cosm, sinm = math.cos(m), math.sin(m)
    xn = inputs / jnp.maximum(
        jnp.linalg.norm(inputs, axis=1, keepdims=True), 1e-12)
    wn = weight / jnp.maximum(
        jnp.linalg.norm(weight, axis=1, keepdims=True), 1e-12)
    cosine = xn @ wn.T
    sine = jnp.sqrt(1.0 - cosine ** 2)
    phi = cosine * cosm - sine * sinm
    phi = jnp.where(cosine + cosm > 0, phi, cosine - sinm * m)
    one_hot = jax.nn.one_hot(labels, cosine.shape[1], dtype=jnp.float32)
    out = (one_hot * phi + (1.0 - one_hot) * cosine) * s
    return out, cosine


if __name__ == "__main__":
    B, F, C = 8, 32, 16          # batch, features, num_classes (small demo)
    s_param, m_param = 64.0, 0.5

    key = jax.random.PRNGKey(0)
    kx, kw, kl = jax.random.split(key, 3)

    inputs = jax.random.normal(kx, (B, F), dtype=jnp.float32)

    # Deterministic xavier_uniform_ init for weight (num_classes, features):
    # bound = sqrt(6 / (fan_in + fan_out)), fan_in=F, fan_out=C.
    bound = math.sqrt(6.0 / (F + C))
    weight = jax.random.uniform(kw, (C, F), dtype=jnp.float32,
                                minval=-bound, maxval=bound)

    labels = jax.random.randint(kl, (B,), 0, C, dtype=jnp.int32)

    out, cosine = arcface_forward(inputs, weight, labels, s=s_param, m=m_param)
    jax.block_until_ready((out, cosine))

    ref_out, ref_cos = _reference(inputs, weight, labels, s=s_param, m=m_param)
    assert out.shape == (B, C) and cosine.shape == (B, C)
    # Tolerances relaxed vs the f32 reference because the MXU matmul runs
    # bf16 operands with f32 accumulation (per perf guidance).
    assert jnp.allclose(cosine, ref_cos, atol=1e-2, rtol=1e-2), (
        float(jnp.max(jnp.abs(cosine - ref_cos))))
    assert jnp.allclose(out, ref_out, atol=1.0, rtol=1e-2), (
        float(jnp.max(jnp.abs(out - ref_out))))

    print("KERNEL_OK")
</pallas_src>

<mosaic_0001>
module attributes {stable_mosaic.version = 11 : i64} {
  func.func @arcface_kernel(%arg0: i32, %arg1: i32, %arg2: memref<1xi32, #tpu.memory_space<smem>>, %arg3: memref<16x32xbf16, #tpu.memory_space<vmem>>, %arg4: memref<32x128xbf16, #tpu.memory_space<vmem>>, %arg5: memref<16x1xi32, #tpu.memory_space<vmem>>, %arg6: memref<16x128xf32, #tpu.memory_space<vmem>>, %arg7: memref<16x128xf32, #tpu.memory_space<vmem>>) attributes {dimension_semantics = [#tpu.dimension_semantics<parallel>, #tpu.dimension_semantics<parallel>], iteration_bounds = array<i64: 1, 1>, scalar_prefetch = 1 : i64, scratch_operands = 0 : i64, tpu.core_type = #tpu.core_type<tc>, window_params = [{transform_indices = @transform_0, window_bounds = array<i64: 16, 32>}, {transform_indices = @transform_1, window_bounds = array<i64: 32, 128>}, {transform_indices = @transform_2, window_bounds = array<i64: 16, 1>}, {transform_indices = @transform_3, window_bounds = array<i64: 16, 128>}, {transform_indices = @transform_4, window_bounds = array<i64: 16, 128>}]} {
    %c0 = arith.constant 0 : index
    %c0_0 = arith.constant 0 : index
    %0 = vector.load %arg3[%c0, %c0_0] : memref<16x32xbf16, #tpu.memory_space<vmem>>, vector<16x32xbf16>
    %c0_1 = arith.constant 0 : index
    %c0_2 = arith.constant 0 : index
    %1 = vector.load %arg4[%c0_1, %c0_2] : memref<32x128xbf16, #tpu.memory_space<vmem>>, vector<32x128xbf16>
    %cst = arith.constant dense<0.000000e+00> : vector<16x128xf32>
    %2 = tpu.matmul %0, %1, %cst {dimension_numbers = #tpu.dot_dimension_numbers<[1], [0], [0], [1], [0, 0, 1, 1], [], []>} : vector<16x32xbf16>, vector<32x128xbf16>, vector<16x128xf32> -> vector<16x128xf32>
    %c0_3 = arith.constant 0 : index
    %c0_4 = arith.constant 0 : index
    %3 = vector.load %arg7[%c0_3, %c0_4] : memref<16x128xf32, #tpu.memory_space<vmem>>, vector<16x128xf32>
    tpu.vector_store %arg7[%c0_3, %c0_4], %2 {strides = array<i32>} : memref<16x128xf32, #tpu.memory_space<vmem>>, vector<16x128xf32>,
    %c1_i32 = arith.constant 1 : i32
    %4 = arith.muli %arg1, %c1_i32 : i32
    %5 = arith.addi %4, %arg0 : i32
    %6 = arith.index_cast %5 : i32 to index
    %7 = memref.load %arg2[%6] : memref<1xi32, #tpu.memory_space<smem>>
    %c0_i32 = arith.constant 0 : i32
    %8 = arith.cmpi ne, %7, %c0_i32 : i32
    %9 = arith.extui %8 : i1 to i32
    %c0_i32_5 = arith.constant 0 : i32
    %10 = arith.cmpi ne, %9, %c0_i32_5 : i32
    scf.if %10 {
      %14 = arith.mulf %2, %2 : vector<16x128xf32>
      %cst_7 = arith.constant 1.000000e+00 : f32
      %15 = vector.broadcast %cst_7 : f32 to vector<16x128xf32>
      %16 = arith.subf %15, %14 : vector<16x128xf32>
      %cst_8 = arith.constant 0.000000e+00 : f32
      %17 = vector.broadcast %cst_8 : f32 to vector<16x128xf32>
      %18 = arith.maximumf %16, %17 : vector<16x128xf32>
      %19 = math.sqrt %18 : vector<16x128xf32>
      %cst_9 = arith.constant 0.87758255 : f32
      %20 = vector.broadcast %cst_9 : f32 to vector<16x128xf32>
      %21 = arith.mulf %2, %20 : vector<16x128xf32>
      %cst_10 = arith.constant 0.47942555 : f32
      %22 = vector.broadcast %cst_10 : f32 to vector<16x128xf32>
      %23 = arith.mulf %19, %22 : vector<16x128xf32>
      %24 = arith.subf %21, %23 : vector<16x128xf32>
      %cst_11 = arith.constant 0.87758255 : f32
      %25 = vector.broadcast %cst_11 : f32 to vector<16x128xf32>
      %26 = arith.addf %2, %25 : vector<16x128xf32>
      %cst_12 = arith.constant 0.000000e+00 : f32
      %27 = vector.broadcast %cst_12 : f32 to vector<16x128xf32>
      %28 = arith.cmpf ogt, %26, %27 : vector<16x128xf32>
      %cst_13 = arith.constant 0.239712775 : f32
      %29 = vector.broadcast %cst_13 : f32 to vector<16x128xf32>
      %30 = arith.subf %2, %29 : vector<16x128xf32>
      %31 = arith.select %28, %24, %30 : vector<16x128xi1>, vector<16x128xf32>
      %c0_14 = arith.constant 0 : index
      %c0_15 = arith.constant 0 : index
      %32 = vector.load %arg5[%c0_14, %c0_15] : memref<16x1xi32, #tpu.memory_space<vmem>>, vector<16x1xi32>
      %c128_i32 = arith.constant 128 : i32
      %33 = arith.muli %arg0, %c128_i32 : i32
      %34 = vector.broadcast %33 : i32 to vector<16x1xi32>
      %35 = arith.subi %32, %34 : vector<16x1xi32>
      %36 = tpu.iota {dimensions = array<i32: 1>} : vector<16x128xi32>
      %37 = vector.broadcast %35 : vector<16x1xi32> to vector<16x128xi32>
      %38 = arith.cmpi eq, %36, %37 : vector<16x128xi32>
      %39 = arith.select %38, %31, %2 : vector<16x128xi1>, vector<16x128xf32>
      %cst_16 = arith.constant 6.400000e+01 : f32
      %40 = vector.broadcast %cst_16 : f32 to vector<16x128xf32>
      %41 = arith.mulf %39, %40 : vector<16x128xf32>
      %c0_17 = arith.constant 0 : index
      %c0_18 = arith.constant 0 : index
      %42 = vector.load %arg6[%c0_17, %c0_18] : memref<16x128xf32, #tpu.memory_space<vmem>>, vector<16x128xf32>
      tpu.vector_store %arg6[%c0_17, %c0_18], %41 {strides = array<i32>} : memref<16x128xf32, #tpu.memory_space<vmem>>, vector<16x128xf32>,
    } else {
    }
    %true = arith.constant true
    %11 = arith.xori %8, %true : i1
    %12 = arith.extui %11 : i1 to i32
    %c0_i32_6 = arith.constant 0 : i32
    %13 = arith.cmpi ne, %12, %c0_i32_6 : i32
    scf.if %13 {
      %cst_7 = arith.constant 6.400000e+01 : f32
      %14 = vector.broadcast %cst_7 : f32 to vector<16x128xf32>
      %15 = arith.mulf %2, %14 : vector<16x128xf32>
      %c0_8 = arith.constant 0 : index
      %c0_9 = arith.constant 0 : index
      %16 = vector.load %arg6[%c0_8, %c0_9] : memref<16x128xf32, #tpu.memory_space<vmem>>, vector<16x128xf32>
      tpu.vector_store %arg6[%c0_8, %c0_9], %15 {strides = array<i32>} : memref<16x128xf32, #tpu.memory_space<vmem>>, vector<16x128xf32>,
    } else {
    }
    return
  }
  func.func @transform_0(%arg0: i32, %arg1: i32, %arg2: memref<1xi32, #tpu.memory_space<smem>>) -> (i32, i32) {
    %c0_i32 = arith.constant 0 : i32
    %c0_i32_0 = arith.constant 0 : i32
    return %arg1, %c0_i32 : i32, i32
  }
  func.func @transform_1(%arg0: i32, %arg1: i32, %arg2: memref<1xi32, #tpu.memory_space<smem>>) -> (i32, i32) {
    %c0_i32 = arith.constant 0 : i32
    %c0_i32_0 = arith.constant 0 : i32
    return %c0_i32, %arg0 : i32, i32
  }
  func.func @transform_2(%arg0: i32, %arg1: i32, %arg2: memref<1xi32, #tpu.memory_space<smem>>) -> (i32, i32) {
    %c0_i32 = arith.constant 0 : i32
    %c0_i32_0 = arith.constant 0 : i32
    return %arg1, %c0_i32 : i32, i32
  }
  func.func @transform_3(%arg0: i32, %arg1: i32, %arg2: memref<1xi32, #tpu.memory_space<smem>>) -> (i32, i32) {
    %c0_i32 = arith.constant 0 : i32
    return %arg1, %arg0 : i32, i32
  }
  func.func @transform_4(%arg0: i32, %arg1: i32, %arg2: memref<1xi32, #tpu.memory_space<smem>>) -> (i32, i32) {
    %c0_i32 = arith.constant 0 : i32
    return %arg1, %arg0 : i32, i32
  }
}

</mosaic_0001>

<llo_original>
// kernel: tpu_custom_call.1
$region0: #{tpu_custom_call.1}
  #allocation0 [shape = 'u32[]', space=smem, size = 0x4, offset = 0x4, fixed_abs, tag = 'smem constant byte address 0x4 - core index']
  #allocation1 [shape = 'u32[72,128]{1,0:T(1,128)}', space=vmem, size = 0x9000, scoped, tag = 'internal scratch']
  #allocation2 [shape = 's32[1]{0}', space=sflag, size = 0x4, scoped, tag = 'scoped memory for tpu_custom_call.1']
  #allocation3 [shape = 's32[1]{0:T(128)S(6)}', space=smem, size = 0x200, scoped, tag = 'prefetched SMEM operand 0']
  %s0 = inlined_call_operand.<no memory space> [shape: s32[1], index: 0, kind: input, shape index: {}]
  %s1 = inlined_call_operand.hbm [shape: bf16[16,32], index: 1, kind: input, shape index: {}]
  %s2 = inlined_call_operand.vmem [shape: bf16[32,128], index: 2, kind: input, shape index: {}]
  %s3 = inlined_call_operand.vmem [shape: s32[16,1], index: 3, kind: input, shape index: {}]
  %s4 = inlined_call_operand.hbm [shape: f32[16,128], index: 4, kind: output, shape index: {0}]
  %s5 = inlined_call_operand.hbm [shape: f32[16,128], index: 5, kind: output, shape index: {1}]
  %6 = xla_tuple %s4, %s5
  %s7 = sld [smem:[#allocation0]]
  $region42: #{tpu_custom_call.1} parent=0
    _
  %s9 = ssub.s32 1, %s7
  %s10 = scalar_select 0, %s9, %s7
  %11 = sst [smem:[#allocation3]] %s0
  $region1: #{tpu_custom_call.1} parent=0
    #allocation4 [shape = 'u8[4096]{0}', space=vmem, size = 0x1000, scoped, tag = 'input window, operand 1, single buffered']
    #allocation5 [shape = 's32[1]{0}', space=sflag, size = 0x4, scoped, tag = 'scoped memory for tpu_custom_call.1']
    #allocation6 [shape = 's32[1]{0}', space=sflag, size = 0x4, scoped, tag = 'scoped memory for tpu_custom_call.1']
    #allocation7 [shape = 'u8[8192]{0}', space=vmem, size = 0x2000, scoped, tag = 'output window, operand 0, single buffered']
    #allocation8 [shape = 'u8[8192]{0}', space=vmem, size = 0x2000, scoped, tag = 'output window, operand 1, single buffered']
    #allocation9 [shape = 's32[1]{0}', space=sflag, size = 0x4, scoped, tag = 'scoped memory for tpu_custom_call.1']
    %12 = vsyncpa [#allocation5], 0
    %13 = vsyncpa [#allocation6], 0
    %14 = vsyncpa [#allocation9], 0
    // Predicated region
    $region2: #{tpu_custom_call.1} parent=1 // pred_check
      _
    $region3: #{tpu_custom_call.1} parent=1 // pred_check_branch
      %16 = sbr.rel (0) target = $region5
    $region4: #{tpu_custom_call.1} parent=1 // pred_region
      %18 = vsyncadd [#allocation5], 0
      %s19 = sshll.u32 %s1, 4
      %s20 = int_to_ptr.hbm [resolvable:$true] %s19
      %s21 = sshll.u32 [#allocation4], 4
      %s22 = int_to_ptr.vmem [resolvable:$true] %s21
      %27 = dma.hbm_to_vmem [thread:$0]  %s20, 128, %s22, [#allocation5], 64, 64, 4
    $region5: #{tpu_custom_call.1} parent=1 // pred_fallthru
      _
    // Predicated region
    $region6: #{tpu_custom_call.1} parent=1 // pred_check
      _
    $region7: #{tpu_custom_call.1} parent=1 // pred_check_branch
      %29 = sbr.rel (0) target = $region9
    $region8: #{tpu_custom_call.1} parent=1 // pred_region
      _
    $region9: #{tpu_custom_call.1} parent=1 // pred_fallthru
      _
    // Predicated region
    $region10: #{tpu_custom_call.1} parent=1 // pred_check
      _
    $region11: #{tpu_custom_call.1} parent=1 // pred_check_branch
      %31 = sbr.rel (0) target = $region13
    $region12: #{tpu_custom_call.1} parent=1 // pred_region
      _
    $region13: #{tpu_custom_call.1} parent=1 // pred_fallthru
      _
    // Predicated region
    $region14: #{tpu_custom_call.1} parent=1 // pred_check
      _
    $region15: #{tpu_custom_call.1} parent=1 // pred_check_branch
      %33 = sbr.rel (0) target = $region17
    $region16: #{tpu_custom_call.1} parent=1 // pred_region
      %35 = dma.done [#allocation5], 128
    $region17: #{tpu_custom_call.1} parent=1 // pred_fallthru
      _
    %v37 = vld [vmem:[#allocation4] sm:$0xf]
    %v38 = vld [vmem:[#allocation4 + $0x4] sm:$0xf]
    %v39 = vld [vmem:[%s2] sm:$0xf]
    %v40 = vld [vmem:[%s2 + $0x4] sm:$0xf]
    %v41 = vld [vmem:[%s2 + $0x8] sm:$0xf]
    %v42 = vld [vmem:[%s2 + $0xc] sm:$0xf]
    %v45 = vunpack.c.l.b16 %v37
    %v46 = vunpack.c.l.b16 %v38
    %v47 = vpack.c.b16 %v46, %v45
    %v52 = vunpack.c.l.b16 %v39
    %v53 = vunpack.c.l.b16 %v40
    %v54 = vunpack.c.l.b16 %v41
    %v55 = vunpack.c.l.b16 %v42
    %v56 = vpack.c.b16 %v53, %v52
    %v57 = vpack.c.b16 %v55, %v54
    %vm60 = vcmask 261120
    %v62 = vsel %vm60, %v47, 0
    %64 = vmatpush.bf16.msra.mxu0 0
    %65 = vmatpush.bf16.msra.mxu0 0
    %66 = vmatpush.bf16.msra.mxu0 0
    %67 = vmatpush.bf16.msra.mxu0 0
    %68 = vmatpush.bf16.msra.mxu0 0
    %69 = vmatpush.bf16.msra.mxu0 0
    %70 = vmatpush.bf16.msra.mxu0 %v57
    %71 = vmatpush.bf16.msra.mxu0 %v56
    %72 = vmatmul.bf16.gmra.mxu0 %v62
    %v73 = vpop.f32.mrf.mxu0
    %v74 = vadd.f32 0.0, %v73
    %v75 = vpop.f32.mrf.mxu0
    %v76 = vadd.f32 0.0, %v75
    %77 = vdwg.mxu0
    %78 = vst [vmem:[#allocation8] sm:$0xff] %v74
    %79 = vst [vmem:[#allocation8 + $0x8] sm:$0xff] %v76
    %s80 = sadd.s32 0, 0
    %s81 = sld [smem:[#allocation3 + %s80]]
    %p82 = scmp.ne.s32.totalorder %s81, 0
    // Predicated region
    $region18: #{tpu_custom_call.1} parent=1 // pred_check
      %p83 = pneg %p82
    $region19: #{tpu_custom_call.1} parent=1 // pred_check_branch
      %85 = sbr.rel (%p83) target = $region21
    $region20: #{tpu_custom_call.1} parent=1 // pred_region
      %v86 = vmul.f32 %v74, %v74
      %v87 = vmul.f32 %v76, %v76
      %v88 = vsub.f32 1.0, %v86
      %v89 = vsub.f32 1.0, %v87
      %v90 = vmax.f32 %v88, 0.0
      %v91 = vmax.f32 %v89, 0.0
      %v92 = vrsqrt.pop %v90
      %v93 = vmul.f32 %v92, %v90
      %v94 = vmul.f32 %v93, %v92
      %v95 = vmul.f32 0.5, %v94
      %v96 = vsub.f32 1.5, %v95
      %v97 = vmul.f32 %v92, %v96
      %v98 = vmul.f32 %v90, %v97
      %vm99 = vcmp.eq.f32.partialorder %v90, inf
      %v100 = vsel %vm99, %v90, %v98
      %vm101 = vcmp.eq.f32.partialorder %v90, 0.0
      %v102 = vand.u32 %v90, 2147483648
      %v103 = vsel %vm101, %v102, %v100
      %v104 = vrsqrt.pop %v91
      %v105 = vmul.f32 %v104, %v91
      %v106 = vmul.f32 %v105, %v104
      %v107 = vmul.f32 0.5, %v106
      %v108 = vsub.f32 1.5, %v107
      %v109 = vmul.f32 %v104, %v108
      %v110 = vmul.f32 %v91, %v109
      %vm111 = vcmp.eq.f32.partialorder %v91, inf
      %v112 = vsel %vm111, %v91, %v110
      %vm113 = vcmp.eq.f32.partialorder %v91, 0.0
      %v114 = vand.u32 %v91, 2147483648
      %v115 = vsel %vm113, %v114, %v112
      %v116 = vmul.f32 %v74, 0.87758255
      %v117 = vmul.f32 %v76, 0.87758255
      %v118 = vmul.f32 %v103, 0.47942555
      %v119 = vmul.f32 %v115, 0.47942555
      %v120 = vsub.f32 %v116, %v118
      %v121 = vsub.f32 %v117, %v119
      %v122 = vadd.f32 %v74, 0.87758255
      %v123 = vadd.f32 %v76, 0.87758255
      %vm124 = vcmp.gt.f32.partialorder %v122, 0.0
      %vm125 = vcmp.gt.f32.partialorder %v123, 0.0
      %v126 = vsub.f32 %v74, 0.23971277
      %v127 = vsub.f32 %v76, 0.23971277
      %v128 = vsel %vm124, %v120, %v126
      %v129 = vsel %vm125, %v121, %v127
      %v130 = vld [vmem:[%s3] sm:$0xff]
      %v131 = vld [vmem:[%s3 + $0x8] sm:$0xff]
      %s132 = smul.u32 0, 128
      %v133 = vstv %s132
      %v134 = vsub.s32 %v130, %v133
      %v135 = vsub.s32 %v131, %v133
      %v136 = vlaneseq
      %v137 = vand.u32 %v136, 127
      %138 = vset.pattern.permute.xlu0 0
      %139 = vperm.xlu0 %138, %v134
      %v140 = vpop.permute.xlu0 %139
      %141 = vset.pattern.permute.xlu0 0
      %142 = vperm.xlu0 %141, %v135
      %v143 = vpop.permute.xlu0 %142
      %vm144 = vcmp.eq.s32.totalorder %v137, %v140
      %vm145 = vcmp.eq.s32.totalorder %v137, %v143
      %v146 = vsel %vm144, %v128, %v74
      %v147 = vsel %vm145, %v129, %v76
      %v148 = vmul.f32 %v146, 64.0
      %v149 = vmul.f32 %v147, 64.0
      %150 = vst [vmem:[#allocation7] sm:$0xff] %v148
      %151 = vst [vmem:[#allocation7 + $0x8] sm:$0xff] %v149
    $region21: #{tpu_custom_call.1} parent=1 // pred_fallthru
      _
    %p152 = scmp.eq.s32.totalorder %s81, 0
    // Predicated region
    $region22: #{tpu_custom_call.1} parent=1 // pred_check
      %p153 = pneg %p152
    $region23: #{tpu_custom_call.1} parent=1 // pred_check_branch
      %155 = sbr.rel (%p153) target = $region25
    $region24: #{tpu_custom_call.1} parent=1 // pred_region
      %v156 = vmul.f32 %v74, 64.0
      %v157 = vmul.f32 %v76, 64.0
      %158 = vst [vmem:[#allocation7] sm:$0xff] %v156
      %159 = vst [vmem:[#allocation7 + $0x8] sm:$0xff] %v157
    $region25: #{tpu_custom_call.1} parent=1 // pred_fallthru
      _
    // Predicated region
    $region26: #{tpu_custom_call.1} parent=1 // pred_check
      _
    $region27: #{tpu_custom_call.1} parent=1 // pred_check_branch
      %161 = sbr.rel (0) target = $region29
    $region28: #{tpu_custom_call.1} parent=1 // pred_region
      %163 = vsyncadd [#allocation6], 0
      %s164 = sshll.u32 [#allocation7], 4
      %s165 = int_to_ptr.vmem [resolvable:$true] %s164
      %s166 = sshll.u32 %s4, 4
      %s167 = int_to_ptr.hbm [resolvable:$true] %s166
      %172 = dma.vmem_to_hbm [thread:$0]  %s165, 256, %s167, [#allocation6], 128, 128, 8
    $region29: #{tpu_custom_call.1} parent=1 // pred_fallthru
      _
    // Predicated region
    $region30: #{tpu_custom_call.1} parent=1 // pred_check
      _
    $region31: #{tpu_custom_call.1} parent=1 // pred_check_branch
      %174 = sbr.rel (0) target = $region33
    $region32: #{tpu_custom_call.1} parent=1 // pred_region
      %176 = vsyncadd [#allocation9], 0
      %s177 = sshll.u32 [#allocation8], 4
      %s178 = int_to_ptr.vmem [resolvable:$true] %s177
      %s179 = sshll.u32 %s5, 4
      %s180 = int_to_ptr.hbm [resolvable:$true] %s179
      %185 = dma.vmem_to_hbm [thread:$0]  %s178, 256, %s180, [#allocation9], 128, 128, 8
    $region33: #{tpu_custom_call.1} parent=1 // pred_fallthru
      _
    // Predicated region
    $region34: #{tpu_custom_call.1} parent=1 // pred_check
      _
    $region35: #{tpu_custom_call.1} parent=1 // pred_check_branch
      %187 = sbr.rel (0) target = $region37
    $region36: #{tpu_custom_call.1} parent=1 // pred_region
      %189 = dma.done [#allocation6], 256
    $region37: #{tpu_custom_call.1} parent=1 // pred_fallthru
      _
    // Predicated region
    $region38: #{tpu_custom_call.1} parent=1 // pred_check
      _
    $region39: #{tpu_custom_call.1} parent=1 // pred_check_branch
      %191 = sbr.rel (0) target = $region41
    $region40: #{tpu_custom_call.1} parent=1 // pred_region
      %193 = dma.done [#allocation9], 256
    $region41: #{tpu_custom_call.1} parent=1 // pred_fallthru
      _
    %194 = vsyncpa [#allocation5], 1
    %195 = vsyncpa [#allocation6], 1
    %196 = vsyncpa [#allocation9], 1

</llo_original>
